<compile_context>
chip_gen: v7x
topology: tpu7x:2x2x1
jax: 0.10.0
libtpu: 0.0.40
codegen_flags: <defaults>
</compile_context>

<pallas_src>
import functools
import math

import jax
import jax.numpy as jnp
from jax import lax
from jax.experimental import pallas as pl
from jax.experimental.pallas import tpu as pltpu


# ----------------------------------------------------------------------------
# helpers
# ----------------------------------------------------------------------------

def _pick_tile(dim, target, align):
    """Largest tile <= target that divides `dim` and is `align`-aligned, else full dim."""
    if dim <= target:
        return dim
    t = (target // align) * align
    while t >= align:
        if dim % t == 0:
            return t
        t -= align
    return dim


def _gelu_tanh(y):
    # TODO(synk): HF RoBERTa uses exact erf-GELU; tanh approximation used here
    # for guaranteed Mosaic lowering (numerically ~1e-3 close).
    c = math.sqrt(2.0 / math.pi)
    return 0.5 * y * (1.0 + jnp.tanh(c * (y + 0.044715 * y * y * y)))


# ----------------------------------------------------------------------------
# Pallas kernels
# ----------------------------------------------------------------------------

def _matmul_kernel(*refs, activation, fuse_ln, eps):
    if fuse_ln:
        x_ref, w_ref, b_ref, r_ref, g_ref, bb_ref, o_ref, acc_ref = refs
    else:
        x_ref, w_ref, b_ref, o_ref, acc_ref = refs

    @pl.when(pl.program_id(2) == 0)
    def _():
        acc_ref[...] = jnp.zeros_like(acc_ref)

    acc_ref[...] += jnp.dot(x_ref[...], w_ref[...],
                            preferred_element_type=jnp.float32)

    @pl.when(pl.program_id(2) == pl.num_programs(2) - 1)
    def _():
        y = acc_ref[...] + b_ref[...].astype(jnp.float32)
        if activation == "gelu":
            y = _gelu_tanh(y)
        if fuse_ln:
            y = y + r_ref[...].astype(jnp.float32)
            mu = jnp.mean(y, axis=-1, keepdims=True)
            var = jnp.mean((y - mu) * (y - mu), axis=-1, keepdims=True)
            y = (y - mu) * lax.rsqrt(var + eps)
            y = y * g_ref[...].astype(jnp.float32) + bb_ref[...].astype(jnp.float32)
        o_ref[...] = y.astype(o_ref.dtype)


def linear(x, w, b, *, activation=None, residual=None, ln_gamma=None,
           ln_beta=None, eps=1e-5, tm=256, tn=256, tk=512):
    """y = act(x @ w + b), optionally followed by LayerNorm(y + residual).

    x: (M, K) bf16, w: (K, N) bf16, b: (N,) f32 -> (M, N) bf16.
    Tiled grid (M//tm, N//tn, K//tk); f32 VMEM accumulator over the K axis.
    """
    M, K = x.shape
    N = w.shape[1]
    fuse_ln = residual is not None

    tm = _pick_tile(M, tm, 8)
    tk = _pick_tile(K, tk, 128)
    tn = N if fuse_ln else _pick_tile(N, tn, 128)   # LN reduces over the full row

    in_specs = [
        pl.BlockSpec((tm, tk), lambda i, j, k: (i, k)),
        pl.BlockSpec((tk, tn), lambda i, j, k: (k, j)),
        pl.BlockSpec((1, tn), lambda i, j, k: (0, j)),
    ]
    inputs = [x, w, b.reshape(1, N)]
    if fuse_ln:
        in_specs += [
            pl.BlockSpec((tm, tn), lambda i, j, k: (i, j)),
            pl.BlockSpec((1, tn), lambda i, j, k: (0, j)),
            pl.BlockSpec((1, tn), lambda i, j, k: (0, j)),
        ]
        inputs += [residual, ln_gamma.reshape(1, N), ln_beta.reshape(1, N)]

    return pl.pallas_call(
        functools.partial(_matmul_kernel, activation=activation,
                          fuse_ln=fuse_ln, eps=eps),
        out_shape=jax.ShapeDtypeStruct((M, N), x.dtype),
        grid=(M // tm, N // tn, K // tk),
        in_specs=in_specs,
        out_specs=pl.BlockSpec((tm, tn), lambda i, j, k: (i, j)),
        scratch_shapes=[pltpu.VMEM((tm, tn), jnp.float32)],
        compiler_params=pltpu.CompilerParams(
            dimension_semantics=("parallel", "parallel", "arbitrary")),
    )(*inputs)


def _ln_kernel(x_ref, g_ref, b_ref, o_ref, *, eps):
    x = x_ref[...].astype(jnp.float32)
    mu = jnp.mean(x, axis=-1, keepdims=True)
    var = jnp.mean((x - mu) * (x - mu), axis=-1, keepdims=True)
    y = (x - mu) * lax.rsqrt(var + eps)
    o_ref[...] = (y * g_ref[...].astype(jnp.float32)
                  + b_ref[...].astype(jnp.float32)).astype(o_ref.dtype)


def layernorm(x, gamma, beta, eps=1e-5, tm=256):
    """LayerNorm over the last axis.  x: (M, H)."""
    M, H = x.shape
    tm = _pick_tile(M, tm, 8)
    return pl.pallas_call(
        functools.partial(_ln_kernel, eps=eps),
        out_shape=jax.ShapeDtypeStruct((M, H), x.dtype),
        grid=(M // tm,),
        in_specs=[
            pl.BlockSpec((tm, H), lambda i: (i, 0)),
            pl.BlockSpec((1, H), lambda i: (0, 0)),
            pl.BlockSpec((1, H), lambda i: (0, 0)),
        ],
        out_specs=pl.BlockSpec((tm, H), lambda i: (i, 0)),
        compiler_params=pltpu.CompilerParams(dimension_semantics=("parallel",)),
    )(x, gamma.reshape(1, H), beta.reshape(1, H))


def _attn_kernel(q_ref, k_ref, v_ref, m_ref, o_ref, *, num_heads, scale):
    q = q_ref[0]                          # (S, H) bf16
    k = k_ref[0]
    v = v_ref[0]
    m = m_ref[0].astype(jnp.float32)      # (1, S) additive mask: 0 / -1e9
    H = q.shape[-1]
    Dh = H // num_heads
    parts = []
    for h in range(num_heads):
        sl = slice(h * Dh, (h + 1) * Dh)
        qh, kh, vh = q[:, sl], k[:, sl], v[:, sl]
        # contract last axes -> no materialized transpose of K
        s = lax.dot_general(qh, kh, (((1,), (1,)), ((), ())),
                            preferred_element_type=jnp.float32)
        s = s * scale + m
        s = s - jnp.max(s, axis=-1, keepdims=True)
        e = jnp.exp(s)
        p = e * pl.reciprocal(jnp.sum(e, axis=-1, keepdims=True), approx=True)
        ctx = jnp.dot(p.astype(vh.dtype), vh, preferred_element_type=jnp.float32)
        parts.append(ctx.astype(o_ref.dtype))
    o_ref[0] = jnp.concatenate(parts, axis=-1)   # single lane-dense store


def attention(q, k, v, add_mask, num_heads):
    """q, k, v: (B, S, H) bf16; add_mask: (B, 1, S) f32 additive mask -> (B, S, H)."""
    B, S, H = q.shape
    scale = 1.0 / math.sqrt(H // num_heads)
    return pl.pallas_call(
        functools.partial(_attn_kernel, num_heads=num_heads, scale=scale),
        out_shape=jax.ShapeDtypeStruct((B, S, H), q.dtype),
        grid=(B,),
        in_specs=[
            pl.BlockSpec((1, S, H), lambda b: (b, 0, 0)),
            pl.BlockSpec((1, S, H), lambda b: (b, 0, 0)),
            pl.BlockSpec((1, S, H), lambda b: (b, 0, 0)),
            pl.BlockSpec((1, 1, S), lambda b: (b, 0, 0)),
        ],
        out_specs=pl.BlockSpec((1, S, H), lambda b: (b, 0, 0)),
        compiler_params=pltpu.CompilerParams(dimension_semantics=("parallel",)),
    )(q, k, v, add_mask)


# ----------------------------------------------------------------------------
# Model (parameter init + forward orchestration)
# ----------------------------------------------------------------------------

def init_params(key, cfg):
    H, I, V, P = cfg["hidden"], cfg["inter"], cfg["vocab"], cfg["max_pos"]
    std = 0.02

    def nrm(k, shape, dtype=jnp.bfloat16):
        return (std * jax.random.normal(k, shape, dtype=jnp.float32)).astype(dtype)

    keys = jax.random.split(key, 4 + cfg["layers"] * 4)
    it = iter(keys)
    params = {
        "word_embeddings": nrm(next(it), (V, H), jnp.float32),
        "position_embeddings": nrm(next(it), (P, H), jnp.float32),
        "token_type_embeddings": nrm(next(it), (1, H), jnp.float32),
        "emb_ln_g": jnp.ones((H,), jnp.float32),
        "emb_ln_b": jnp.zeros((H,), jnp.float32),
        "layers": [],
    }
    for _ in range(cfg["layers"]):
        layer = {
            # fused Q|K|V projection
            "wqkv": nrm(next(it), (H, 3 * H)), "bqkv": jnp.zeros((3 * H,), jnp.float32),
            "wo": nrm(next(it), (H, H)), "bo": jnp.zeros((H,), jnp.float32),
            "ln1_g": jnp.ones((H,), jnp.float32), "ln1_b": jnp.zeros((H,), jnp.float32),
            "w1": nrm(next(it), (H, I)), "b1": jnp.zeros((I,), jnp.float32),
            "w2": nrm(next(it), (I, H)), "b2": jnp.zeros((H,), jnp.float32),
            "ln2_g": jnp.ones((H,), jnp.float32), "ln2_b": jnp.zeros((H,), jnp.float32),
        }
        params["layers"].append(layer)
    return params


def roberta_forward(params, input_ids, attention_mask, cfg):
    """Mirrors RoBerta.forward: returns (last_hidden_state, ~mask.bool())."""
    B, S = input_ids.shape
    H, nH = cfg["hidden"], cfg["heads"]
    pad_id = cfg["pad_id"]

    # --- embeddings (gathers are JAX glue; LayerNorm is a Pallas kernel) ---
    not_pad = (input_ids != pad_id).astype(jnp.int32)
    position_ids = jnp.cumsum(not_pad, axis=1) * not_pad + pad_id   # RoBERTa position ids
    emb = (jnp.take(params["word_embeddings"], input_ids, axis=0)
           + jnp.take(params["position_embeddings"], position_ids, axis=0)
           + params["token_type_embeddings"][0])                    # token_type_ids = None -> 0
    h = emb.reshape(B * S, H).astype(jnp.bfloat16)
    h = layernorm(h, params["emb_ln_g"], params["emb_ln_b"])

    # additive attention mask precomputed once: 0 where attend, -1e9 where pad
    add_mask = ((1.0 - attention_mask.astype(jnp.float32)) * -1e9)[:, None, :]  # (B,1,S)

    for lyr in params["layers"]:
        # --- self attention ---
        qkv = linear(h, lyr["wqkv"], lyr["bqkv"]).reshape(B, S, 3 * H)
        q, k, v = qkv[..., :H], qkv[..., H:2 * H], qkv[..., 2 * H:]
        ctx = attention(q, k, v, add_mask, nH).reshape(B * S, H)
        # out-projection fused with residual-add + LayerNorm
        h = linear(ctx, lyr["wo"], lyr["bo"],
                   residual=h, ln_gamma=lyr["ln1_g"], ln_beta=lyr["ln1_b"])
        # --- feed-forward ---
        ff = linear(h, lyr["w1"], lyr["b1"], activation="gelu")
        h = linear(ff, lyr["w2"], lyr["b2"],
                   residual=h, ln_gamma=lyr["ln2_g"], ln_beta=lyr["ln2_b"])

    xs = h.reshape(B, S, H).astype(jnp.float32)   # last_hidden_state
    out_mask = ~attention_mask.astype(jnp.bool_)  # True where padding
    return xs, out_mask


# ----------------------------------------------------------------------------
# Main
# ----------------------------------------------------------------------------

if __name__ == "__main__":
    cfg = dict(vocab=100, hidden=32, heads=4, inter=64, layers=2, max_pos=16, pad_id=1)
    B, S = 2, 8

    key = jax.random.PRNGKey(0)
    k_params, k_ids = jax.random.split(key)
    params = init_params(k_params, cfg)

    input_ids = jax.random.randint(k_ids, (B, S), 3, cfg["vocab"], dtype=jnp.int32)
    lengths = jnp.array([S, 5])                              # second sequence is padded
    attention_mask = (jnp.arange(S)[None, :] < lengths[:, None]).astype(jnp.int32)
    input_ids = jnp.where(attention_mask == 1, input_ids, cfg["pad_id"])

    xs, mask_out = roberta_forward(params, input_ids, attention_mask, cfg)
    jax.block_until_ready((xs, mask_out))

    assert xs.shape == (B, S, cfg["hidden"]) and xs.dtype == jnp.float32
    assert mask_out.shape == (B, S) and mask_out.dtype == jnp.bool_
    print("KERNEL_OK")
</pallas_src>

<mosaic_0001>
module attributes {stable_mosaic.version = 11 : i64} {
  func.func @_ln_kernel(%arg0: i32, %arg1: memref<16x32xbf16, #tpu.memory_space<vmem>>, %arg2: memref<1x32xf32, #tpu.memory_space<vmem>>, %arg3: memref<1x32xf32, #tpu.memory_space<vmem>>, %arg4: memref<16x32xbf16, #tpu.memory_space<vmem>>) attributes {dimension_semantics = [#tpu.dimension_semantics<parallel>], iteration_bounds = array<i64: 1>, scalar_prefetch = 0 : i64, scratch_operands = 0 : i64, tpu.core_type = #tpu.core_type<tc>, window_params = [{transform_indices = @transform_0, window_bounds = array<i64: 16, 32>}, {pipeline_mode = #tpu.pipeline_mode<synchronous>, transform_indices = @transform_1, window_bounds = array<i64: 1, 32>}, {pipeline_mode = #tpu.pipeline_mode<synchronous>, transform_indices = @transform_2, window_bounds = array<i64: 1, 32>}, {transform_indices = @transform_3, window_bounds = array<i64: 16, 32>}]} {
    %c0 = arith.constant 0 : index
    %c0_0 = arith.constant 0 : index
    %0 = vector.load %arg1[%c0, %c0_0] : memref<16x32xbf16, #tpu.memory_space<vmem>>, vector<16x32xbf16>
    %1 = arith.extf %0 : vector<16x32xbf16> to vector<16x32xf32>
    %cst = arith.constant dense<0.000000e+00> : vector<16xf32>
    %2 = vector.multi_reduction <add>, %1, %cst [1] : vector<16x32xf32> to vector<16xf32>
    %3 = vector.shape_cast %2 : vector<16xf32> to vector<16x1xf32>
    %cst_1 = arith.constant 3.200000e+01 : f32
    %4 = vector.broadcast %cst_1 : f32 to vector<16x1xf32>
    %5 = arith.divf %3, %4 : vector<16x1xf32>
    %6 = vector.broadcast %5 : vector<16x1xf32> to vector<16x32xf32>
    %7 = arith.subf %1, %6 : vector<16x32xf32>
    %8 = vector.broadcast %5 : vector<16x1xf32> to vector<16x32xf32>
    %9 = arith.subf %1, %8 : vector<16x32xf32>
    %10 = arith.mulf %7, %9 : vector<16x32xf32>
    %cst_2 = arith.constant dense<0.000000e+00> : vector<16xf32>
    %11 = vector.multi_reduction <add>, %10, %cst_2 [1] : vector<16x32xf32> to vector<16xf32>
    %12 = vector.shape_cast %11 : vector<16xf32> to vector<16x1xf32>
    %cst_3 = arith.constant 3.200000e+01 : f32
    %13 = vector.broadcast %cst_3 : f32 to vector<16x1xf32>
    %14 = arith.divf %12, %13 : vector<16x1xf32>
    %15 = vector.broadcast %5 : vector<16x1xf32> to vector<16x32xf32>
    %16 = arith.subf %1, %15 : vector<16x32xf32>
    %cst_4 = arith.constant 9.99999974E-6 : f32
    %17 = vector.broadcast %cst_4 : f32 to vector<16x1xf32>
    %18 = arith.addf %14, %17 : vector<16x1xf32>
    %19 = math.rsqrt %18 : vector<16x1xf32>
    %20 = vector.broadcast %19 : vector<16x1xf32> to vector<16x32xf32>
    %21 = arith.mulf %16, %20 : vector<16x32xf32>
    %c0_5 = arith.constant 0 : index
    %c0_6 = arith.constant 0 : index
    %22 = vector.load %arg2[%c0_5, %c0_6] : memref<1x32xf32, #tpu.memory_space<vmem>>, vector<1x32xf32>
    %23 = vector.broadcast %22 : vector<1x32xf32> to vector<16x32xf32>
    %24 = arith.mulf %21, %23 : vector<16x32xf32>
    %c0_7 = arith.constant 0 : index
    %c0_8 = arith.constant 0 : index
    %25 = vector.load %arg3[%c0_7, %c0_8] : memref<1x32xf32, #tpu.memory_space<vmem>>, vector<1x32xf32>
    %26 = vector.broadcast %25 : vector<1x32xf32> to vector<16x32xf32>
    %27 = arith.addf %24, %26 : vector<16x32xf32>
    %28 = arith.truncf %27 : vector<16x32xf32> to vector<16x32xbf16>
    %c0_9 = arith.constant 0 : index
    %c0_10 = arith.constant 0 : index
    %29 = vector.load %arg4[%c0_9, %c0_10] : memref<16x32xbf16, #tpu.memory_space<vmem>>, vector<16x32xbf16>
    tpu.vector_store %arg4[%c0_9, %c0_10], %28 {strides = array<i32>} : memref<16x32xbf16, #tpu.memory_space<vmem>>, vector<16x32xbf16>,
    return
  }
  func.func @transform_0(%arg0: i32) -> (i32, i32) {
    %c0_i32 = arith.constant 0 : i32
    %c0_i32_0 = arith.constant 0 : i32
    return %arg0, %c0_i32 : i32, i32
  }
  func.func @transform_1(%arg0: i32) -> (i32, i32) {
    %c0_i32 = arith.constant 0 : i32
    %c0_i32_0 = arith.constant 0 : i32
    %c0_i32_1 = arith.constant 0 : i32
    return %c0_i32, %c0_i32_0 : i32, i32
  }
  func.func @transform_2(%arg0: i32) -> (i32, i32) {
    %c0_i32 = arith.constant 0 : i32
    %c0_i32_0 = arith.constant 0 : i32
    %c0_i32_1 = arith.constant 0 : i32
    return %c0_i32, %c0_i32_0 : i32, i32
  }
  func.func @transform_3(%arg0: i32) -> (i32, i32) {
    %c0_i32 = arith.constant 0 : i32
    %c0_i32_0 = arith.constant 0 : i32
    return %arg0, %c0_i32 : i32, i32
  }
}

</mosaic_0001>

<llo_original>
// kernel: tpu_custom_call.1
$region0: #{tpu_custom_call.1}
  #allocation0 [shape = 'u32[]', space=smem, size = 0x4, offset = 0x4, fixed_abs, tag = 'smem constant byte address 0x4 - core index']
  #allocation1 [shape = 'u32[144,128]{1,0:T(1,128)}', space=vmem, size = 0x12000, scoped, tag = 'internal scratch']
  %s0 = inlined_call_operand.hbm [shape: bf16[16,32], index: 0, kind: input, shape index: {}]
  %s1 = inlined_call_operand.vmem [shape: f32[1,32], index: 1, kind: input, shape index: {}]
  %s2 = inlined_call_operand.vmem [shape: f32[1,32], index: 2, kind: input, shape index: {}]
  %s3 = inlined_call_operand.hbm [shape: bf16[16,32], index: 3, kind: output, shape index: {}]
  %s4 = sld [smem:[#allocation0]]
  $region26: #{tpu_custom_call.1} parent=0
    _
  %s6 = ssub.s32 1, %s4
  %s7 = scalar_select 0, %s6, %s4
  $region1: #{tpu_custom_call.1} parent=0
    #allocation2 [shape = 'u8[4096]{0}', space=vmem, size = 0x1000, scoped, tag = 'input window, operand 0, single buffered']
    #allocation3 [shape = 's32[1]{0}', space=sflag, size = 0x4, scoped, tag = 'scoped memory for tpu_custom_call.1']
    #allocation4 [shape = 's32[1]{0}', space=sflag, size = 0x4, scoped, tag = 'scoped memory for tpu_custom_call.1']
    #allocation5 [shape = 'u8[4096]{0}', space=vmem, size = 0x1000, scoped, tag = 'output window, operand 0, single buffered']
    %8 = vsyncpa [#allocation3], 0
    %9 = vsyncpa [#allocation4], 0
    // Predicated region
    $region2: #{tpu_custom_call.1} parent=1 // pred_check
      _
    $region3: #{tpu_custom_call.1} parent=1 // pred_check_branch
      %11 = sbr.rel (0) target = $region5
    $region4: #{tpu_custom_call.1} parent=1 // pred_region
      %s13 = ssub.s32 128, 128
      %14 = vsyncadd [#allocation3], %s13
      %s15 = sshll.u32 [#allocation2], 4
      %s16 = int_to_ptr.vmem [resolvable:$true] %s15
      %21 = dma.hbm_to_vmem [thread:$0]  %s0, 128, %s16, [#allocation3], 64, 64, 4
    $region5: #{tpu_custom_call.1} parent=1 // pred_fallthru
      _
    // Predicated region
    $region6: #{tpu_custom_call.1} parent=1 // pred_check
      _
    $region7: #{tpu_custom_call.1} parent=1 // pred_check_branch
      %23 = sbr.rel (0) target = $region9
    $region8: #{tpu_custom_call.1} parent=1 // pred_region
      _
    $region9: #{tpu_custom_call.1} parent=1 // pred_fallthru
      _
    // Predicated region
    $region10: #{tpu_custom_call.1} parent=1 // pred_check
      _
    $region11: #{tpu_custom_call.1} parent=1 // pred_check_branch
      %25 = sbr.rel (0) target = $region13
    $region12: #{tpu_custom_call.1} parent=1 // pred_region
      _
    $region13: #{tpu_custom_call.1} parent=1 // pred_fallthru
      _
    // Predicated region
    $region14: #{tpu_custom_call.1} parent=1 // pred_check
      _
    $region15: #{tpu_custom_call.1} parent=1 // pred_check_branch
      %27 = sbr.rel (0) target = $region17
    $region16: #{tpu_custom_call.1} parent=1 // pred_region
      %28 = dma.done [#allocation3], 128
    $region17: #{tpu_custom_call.1} parent=1 // pred_fallthru
      _
    %v29 = vld [vmem:[#allocation2] sm:$0xf]
    %v30 = vld [vmem:[#allocation2 + $0x4] sm:$0xf]
    %v31 = vunpack.c.l.bf16 %v29
    %v32 = vunpack.c.l.bf16 %v30
    %vm33 = vcmask 261120
    %v34 = vsel %vm33, %v31, 0.0
    %35 = vadd.xlane.f32.xlu0 %v34
    %v36 = vpop.xlane.xlu0 %35
    %v37 = vsel %vm33, %v32, 0.0
    %38 = vadd.xlane.f32.xlu0 %v37
    %v39 = vpop.xlane.xlu0 %38
    %v40 = vrcp.pop 32.0
    %v41 = vmul.f32 %v36, %v40
    %v42 = vmul.f32 %v39, %v40
    %v43 = vsub.f32 %v31, %v41
    %v44 = vsub.f32 %v32, %v42
    %v45 = vmul.f32 %v43, %v43
    %v46 = vmul.f32 %v44, %v44
    %v47 = vsel %vm33, %v45, 0.0
    %48 = vadd.xlane.f32.xlu0 %v47
    %v49 = vpop.xlane.xlu0 %48
    %v50 = vsel %vm33, %v46, 0.0
    %51 = vadd.xlane.f32.xlu0 %v50
    %v52 = vpop.xlane.xlu0 %51
    %v53 = vmul.f32 %v49, %v40
    %v54 = vmul.f32 %v52, %v40
    %v55 = vadd.f32 %v53, 1e-05
    %v56 = vadd.f32 %v54, 1e-05
    %v57 = vrsqrt.pop %v55
    %v58 = vrsqrt.pop %v56
    %v59 = vmul.f32 %v43, %v57
    %v60 = vmul.f32 %v44, %v58
    %v61 = vld [vmem:[%s1] sm:$0x1]
    %v63 = vlaneseq
    %v64 = vshrl.u32 %v63, 7
    %v65 = vsub.s32 0, %v64
    %v66 = vrot.slane %v61, %v65
    %v68 = vmul.f32 %v59, %v66
    %v69 = vmul.f32 %v60, %v66
    %v70 = vld [vmem:[%s2] sm:$0x1]
    %v72 = vlaneseq
    %v73 = vshrl.u32 %v72, 7
    %v74 = vsub.s32 0, %v73
    %v75 = vrot.slane %v70, %v74
    %v77 = vadd.f32 %v68, %v75
    %v78 = vadd.f32 %v69, %v75
    %v79 = vpack.c.bf16 %v78, %v77
    %v81 = vunpack.c.l.b16 %v79
    %v82 = vunpack.c.h.b16 %v79
    %v83 = vpack.c.b16 %v81, %v81
    %v84 = vpack.c.b16 %v82, %v82
    %vm87 = vcmask 257024
    %88 = vst.msk [vmem:[#allocation5] sm:$0xf] %vm87, %v83
    %89 = vst.msk [vmem:[#allocation5 + $0x4] sm:$0xf] %vm87, %v84
    // Predicated region
    $region18: #{tpu_custom_call.1} parent=1 // pred_check
      _
    $region19: #{tpu_custom_call.1} parent=1 // pred_check_branch
      %91 = sbr.rel (0) target = $region21
    $region20: #{tpu_custom_call.1} parent=1 // pred_region
      %s93 = ssub.s32 128, 128
      %94 = vsyncadd [#allocation4], %s93
      %s95 = sshll.u32 [#allocation5], 4
      %s96 = int_to_ptr.vmem [resolvable:$true] %s95
      %101 = dma.vmem_to_hbm [thread:$0]  %s96, 128, %s3, [#allocation4], 64, 64, 4
    $region21: #{tpu_custom_call.1} parent=1 // pred_fallthru
      _
    // Predicated region
    $region22: #{tpu_custom_call.1} parent=1 // pred_check
      _
    $region23: #{tpu_custom_call.1} parent=1 // pred_check_branch
      %103 = sbr.rel (0) target = $region25
    $region24: #{tpu_custom_call.1} parent=1 // pred_region
      %104 = dma.done [#allocation4], 128
    $region25: #{tpu_custom_call.1} parent=1 // pred_fallthru
      _
    %105 = vsyncpa [#allocation3], 1
    %106 = vsyncpa [#allocation4], 1

</llo_original>
